<compile_context>
chip_gen: v6e
topology: v6e:2x2x1
jax: 0.10.0
libtpu: 0.0.40
codegen_flags: <defaults>
</compile_context>

<pallas_src>
import functools

import jax
import jax.numpy as jnp
from jax.experimental import pallas as pl
from jax.experimental.pallas import tpu as pltpu

EPS = 1e-5
# Chosen to fit v7x's 64 MiB physical VMEM (also the default scoped budget on
# v6e/v7x); v5e/v6e have more headroom so this is safe on every generation.
_VMEM_LIMIT_BYTES = 32 * 1024 * 1024


# -----------------------------------------------------------------------------
# Pass 1: BatchNorm batch statistics (per-feature sum and sum of squares).
# Grid axis over batch tiles is a reduction -> "arbitrary"; the (1, F) outputs
# use a constant index_map so they stay resident as accumulators.
# -----------------------------------------------------------------------------
def _bn_stats_kernel(x_ref, sum_ref, sq_ref):
    @pl.when(pl.program_id(0) == 0)
    def _init():
        sum_ref[...] = jnp.zeros_like(sum_ref)
        sq_ref[...] = jnp.zeros_like(sq_ref)

    x = x_ref[...]                                        # (TILE_B, F) f32
    sum_ref[...] += jnp.sum(x, axis=0, keepdims=True)     # (1, F)
    sq_ref[...] += jnp.sum(x * x, axis=0, keepdims=True)  # (1, F)


# -----------------------------------------------------------------------------
# Pass 2: apply BN + fc1(ReLU) + fc2 + sigmoid for one batch tile.
#   a_ref   : (F, F*H)  with A[f, f*H + h] = w1[h]   (fc1 weight folded into
#                                                     a lane-dense replication)
#   b1t_ref : (1, F*H)  with b1t[0, f*H + h] = b1[h]
#   w2_ref  : (F*H, 1)  fc2 weight as a column -> MXU matvec
#   b2_ref  : (1,) in SMEM
# -----------------------------------------------------------------------------
def _apply_kernel(inv_n, x_ref, sum_ref, sq_ref, gamma_ref, beta_ref,
                  a_ref, b1t_ref, w2_ref, b2_ref, out_ref):
    x = x_ref[...]                                        # (TILE_B, F)

    # BatchNorm (training mode: biased batch variance), folded to scale/shift.
    mean = sum_ref[...] * inv_n                           # (1, F)
    var = sq_ref[...] * inv_n - mean * mean               # (1, F)
    scale = jax.lax.rsqrt(var + EPS) * gamma_ref[...]     # (1, F)
    shift = beta_ref[...] - mean * scale                  # (1, F)
    xn = x * scale + shift                                # (TILE_B, F)

    # fc1 + ReLU, lane-dense (TILE_B, F*H) via a single MXU matmul.
    pre = jnp.dot(xn, a_ref[...], preferred_element_type=jnp.float32)
    h = jnp.maximum(pre + b1t_ref[...], 0.0)              # (TILE_B, F*H)

    # fc2: MXU matvec reduction over F*H, then bias + sigmoid.
    z = jnp.dot(h, w2_ref[...], preferred_element_type=jnp.float32)
    z = z + b2_ref[0]                                     # (TILE_B, 1)
    out_ref[...] = jax.nn.sigmoid(z)


# -----------------------------------------------------------------------------
# Wrapper
# -----------------------------------------------------------------------------
def nn_forward(x, params, tile_b=512):
    """Pallas forward pass of the NN module. x: (B, F) float32 -> (B, 1)."""
    gamma, beta, w1, b1, w2, b2 = params
    B, F = x.shape
    H = w1.shape[-1]

    # Batch tile: multiple of 8 (sublane), >= 8, and no bigger than needed.
    tile_b = max(8, (tile_b // 8) * 8)
    b_pad = ((B + tile_b - 1) // tile_b) * tile_b
    nb = b_pad // tile_b
    x_pad = jnp.pad(x, ((0, b_pad - B), (0, 0))) if b_pad != B else x

    # Precompute lane-dense fused fc1 operands and the fc2 column.
    a_mat = jnp.kron(jnp.eye(F, dtype=jnp.float32), w1.reshape(1, H))  # (F, F*H)
    b1t = jnp.tile(b1.reshape(1, H), (1, F))                           # (1, F*H)
    w2col = w2.reshape(F * H, 1)                                       # (F*H, 1)
    b2s = b2.reshape(-1)[:1]                                           # (1,) scalar

    # ---- Pass 1: global batch statistics (zero-padded rows add 0). ----------
    bsum, bsq = pl.pallas_call(
        _bn_stats_kernel,
        out_shape=(jax.ShapeDtypeStruct((1, F), jnp.float32),
                   jax.ShapeDtypeStruct((1, F), jnp.float32)),
        grid=(nb,),
        in_specs=[pl.BlockSpec((tile_b, F), lambda i: (i, 0))],
        out_specs=(pl.BlockSpec((1, F), lambda i: (0, 0)),
                   pl.BlockSpec((1, F), lambda i: (0, 0))),
        compiler_params=pltpu.CompilerParams(
            dimension_semantics=("arbitrary",),
            vmem_limit_bytes=_VMEM_LIMIT_BYTES),
    )(x_pad)

    # ---- Pass 2: apply BN + fc1 + fc2 + sigmoid per batch tile. -------------
    out_pad = pl.pallas_call(
        functools.partial(_apply_kernel, 1.0 / float(B)),
        out_shape=jax.ShapeDtypeStruct((b_pad, 1), jnp.float32),
        grid=(nb,),
        in_specs=[
            pl.BlockSpec((tile_b, F), lambda i: (i, 0)),      # x tile
            pl.BlockSpec((1, F), lambda i: (0, 0)),           # batch sum
            pl.BlockSpec((1, F), lambda i: (0, 0)),           # batch sumsq
            pl.BlockSpec((1, F), lambda i: (0, 0)),           # gamma
            pl.BlockSpec((1, F), lambda i: (0, 0)),           # beta
            pl.BlockSpec((F, F * H), lambda i: (0, 0)),       # A (fc1 folded)
            pl.BlockSpec((1, F * H), lambda i: (0, 0)),       # b1 tiled
            pl.BlockSpec((F * H, 1), lambda i: (0, 0)),       # fc2 column
            pl.BlockSpec(memory_space=pltpu.MemorySpace.SMEM),  # b2 scalar
        ],
        out_specs=pl.BlockSpec((tile_b, 1), lambda i: (i, 0)),
        compiler_params=pltpu.CompilerParams(
            dimension_semantics=("parallel",),
            vmem_limit_bytes=_VMEM_LIMIT_BYTES),
    )(x_pad, bsum, bsq, gamma, beta, a_mat, b1t, w2col, b2s)

    return out_pad[:B]


# -----------------------------------------------------------------------------
# Parameters / reference
# -----------------------------------------------------------------------------
def init_params(key, input_size, hidden_dim):
    """Deterministic synthetic parameters matching the PyTorch module shapes."""
    k1, k2, k3, k4, k5, k6 = jax.random.split(key, 6)
    gamma = jax.random.uniform(k1, (1, input_size), jnp.float32, 0.5, 1.5)
    beta = jax.random.normal(k2, (1, input_size), jnp.float32) * 0.1
    w1 = jax.random.normal(k3, (1, hidden_dim), jnp.float32) * 0.5     # fc1 weight
    b1 = jax.random.normal(k4, (1, hidden_dim), jnp.float32) * 0.1     # fc1 bias
    w2 = jax.random.normal(k5, (input_size, hidden_dim), jnp.float32) * 0.05  # fc2 w
    b2 = jax.random.normal(k6, (1, 1), jnp.float32) * 0.1              # fc2 bias
    return gamma, beta, w1, b1, w2, b2


def reference_forward(x, params):
    """Pure-JAX reference mirroring the PyTorch forward (training-mode BN)."""
    gamma, beta, w1, b1, w2, b2 = params
    B = x.shape[0]
    mean = jnp.mean(x, axis=0, keepdims=True)
    var = jnp.mean((x - mean) ** 2, axis=0, keepdims=True)
    xn = (x - mean) / jnp.sqrt(var + EPS) * gamma + beta
    flat = xn.reshape(-1, 1)                               # (B*F, 1)
    h = jax.nn.relu(flat @ w1 + b1)                        # (B*F, H)
    h = h.reshape(B, -1)                                   # (B, F*H)
    z = h @ w2.reshape(-1, 1) + b2                         # (B, 1)
    return jax.nn.sigmoid(z)


if __name__ == "__main__":
    INPUT_SIZE = 16
    HIDDEN_DIM = 32
    BATCH = 30          # not a multiple of the tile -> exercises zero-padding
    TILE_B = 8          # small tile so the demo runs a multi-step grid

    key = jax.random.PRNGKey(0)
    kx, kp = jax.random.split(key)
    x = jax.random.normal(kx, (BATCH, INPUT_SIZE), jnp.float32)
    params = init_params(kp, INPUT_SIZE, HIDDEN_DIM)

    out = nn_forward(x, params, tile_b=TILE_B)
    out = jax.block_until_ready(out)

    ref = reference_forward(x, params)
    assert out.shape == (BATCH, 1)
    assert jnp.allclose(out, ref, atol=5e-5, rtol=1e-5), (out, ref)

    print("KERNEL_OK")
</pallas_src>

<mosaic_0001>
module attributes {stable_mosaic.version = 11 : i64} {
  func.func @_bn_stats_kernel(%arg0: i32, %arg1: memref<8x16xf32, #tpu.memory_space<vmem>>, %arg2: memref<1x16xf32, #tpu.memory_space<vmem>>, %arg3: memref<1x16xf32, #tpu.memory_space<vmem>>) attributes {dimension_semantics = [#tpu.dimension_semantics<arbitrary>], iteration_bounds = array<i64: 4>, scalar_prefetch = 0 : i64, scratch_operands = 0 : i64, tpu.core_type = #tpu.core_type<tc>, window_params = [{transform_indices = @transform_0, window_bounds = array<i64: 8, 16>}, {pipeline_mode = #tpu.pipeline_mode<synchronous>, transform_indices = @transform_1, window_bounds = array<i64: 1, 16>}, {pipeline_mode = #tpu.pipeline_mode<synchronous>, transform_indices = @transform_2, window_bounds = array<i64: 1, 16>}]} {
    %c0_i32 = arith.constant 0 : i32
    %0 = arith.cmpi eq, %arg0, %c0_i32 : i32
    %1 = arith.extui %0 : i1 to i32
    %c0_i32_0 = arith.constant 0 : i32
    %2 = arith.cmpi ne, %1, %c0_i32_0 : i32
    scf.if %2 {
      %cst_11 = arith.constant 0.000000e+00 : f32
      %15 = vector.broadcast %cst_11 : f32 to vector<1x16xf32>
      %c0_12 = arith.constant 0 : index
      %c0_13 = arith.constant 0 : index
      %16 = vector.load %arg2[%c0_12, %c0_13] : memref<1x16xf32, #tpu.memory_space<vmem>>, vector<1x16xf32>
      tpu.vector_store %arg2[%c0_12, %c0_13], %15 {strides = array<i32>} : memref<1x16xf32, #tpu.memory_space<vmem>>, vector<1x16xf32>,
      %cst_14 = arith.constant 0.000000e+00 : f32
      %17 = vector.broadcast %cst_14 : f32 to vector<1x16xf32>
      %c0_15 = arith.constant 0 : index
      %c0_16 = arith.constant 0 : index
      %18 = vector.load %arg3[%c0_15, %c0_16] : memref<1x16xf32, #tpu.memory_space<vmem>>, vector<1x16xf32>
      tpu.vector_store %arg3[%c0_15, %c0_16], %17 {strides = array<i32>} : memref<1x16xf32, #tpu.memory_space<vmem>>, vector<1x16xf32>,
    } else {
    }
    %c0 = arith.constant 0 : index
    %c0_1 = arith.constant 0 : index
    %3 = vector.load %arg1[%c0, %c0_1] : memref<8x16xf32, #tpu.memory_space<vmem>>, vector<8x16xf32>
    %c0_2 = arith.constant 0 : index
    %c0_3 = arith.constant 0 : index
    %4 = vector.load %arg2[%c0_2, %c0_3] : memref<1x16xf32, #tpu.memory_space<vmem>>, vector<1x16xf32>
    %cst = arith.constant dense<0.000000e+00> : vector<16xf32>
    %5 = vector.multi_reduction <add>, %3, %cst [0] : vector<8x16xf32> to vector<16xf32>
    %6 = vector.shape_cast %5 : vector<16xf32> to vector<1x16xf32>
    %7 = arith.addf %4, %6 : vector<1x16xf32>
    %c0_4 = arith.constant 0 : index
    %c0_5 = arith.constant 0 : index
    %8 = vector.load %arg2[%c0_4, %c0_5] : memref<1x16xf32, #tpu.memory_space<vmem>>, vector<1x16xf32>
    tpu.vector_store %arg2[%c0_4, %c0_5], %7 {strides = array<i32>} : memref<1x16xf32, #tpu.memory_space<vmem>>, vector<1x16xf32>,
    %c0_6 = arith.constant 0 : index
    %c0_7 = arith.constant 0 : index
    %9 = vector.load %arg3[%c0_6, %c0_7] : memref<1x16xf32, #tpu.memory_space<vmem>>, vector<1x16xf32>
    %10 = arith.mulf %3, %3 : vector<8x16xf32>
    %cst_8 = arith.constant dense<0.000000e+00> : vector<16xf32>
    %11 = vector.multi_reduction <add>, %10, %cst_8 [0] : vector<8x16xf32> to vector<16xf32>
    %12 = vector.shape_cast %11 : vector<16xf32> to vector<1x16xf32>
    %13 = arith.addf %9, %12 : vector<1x16xf32>
    %c0_9 = arith.constant 0 : index
    %c0_10 = arith.constant 0 : index
    %14 = vector.load %arg3[%c0_9, %c0_10] : memref<1x16xf32, #tpu.memory_space<vmem>>, vector<1x16xf32>
    tpu.vector_store %arg3[%c0_9, %c0_10], %13 {strides = array<i32>} : memref<1x16xf32, #tpu.memory_space<vmem>>, vector<1x16xf32>,
    return
  }
  func.func @transform_0(%arg0: i32) -> (i32, i32) {
    %c0_i32 = arith.constant 0 : i32
    %c0_i32_0 = arith.constant 0 : i32
    return %arg0, %c0_i32 : i32, i32
  }
  func.func @transform_1(%arg0: i32) -> (i32, i32) {
    %c0_i32 = arith.constant 0 : i32
    %c0_i32_0 = arith.constant 0 : i32
    %c0_i32_1 = arith.constant 0 : i32
    return %c0_i32, %c0_i32_0 : i32, i32
  }
  func.func @transform_2(%arg0: i32) -> (i32, i32) {
    %c0_i32 = arith.constant 0 : i32
    %c0_i32_0 = arith.constant 0 : i32
    %c0_i32_1 = arith.constant 0 : i32
    return %c0_i32, %c0_i32_0 : i32, i32
  }
}

</mosaic_0001>

<llo_original>
// kernel: tpu_custom_call.1
$region0: #{tpu_custom_call.1}
  #allocation0 [shape = 'u32[]', space=smem, size = 0x4, offset = 0x4, fixed_abs, tag = 'smem constant byte address 0x4 - core index']
  #allocation1 [shape = 'u32[144,128]{1,0:T(1,128)}', space=vmem, size = 0x12000, scoped, tag = 'internal scratch']
  %s0 = inlined_call_operand.vmem [shape: f32[32,16], index: 0, kind: input, shape index: {}]
  %s1 = inlined_call_operand.hbm [shape: f32[1,16], index: 1, kind: output, shape index: {0}]
  %s2 = inlined_call_operand.hbm [shape: f32[1,16], index: 2, kind: output, shape index: {1}]
  %3 = xla_tuple %s1, %s2
  %s4 = sld [smem:[#allocation0]]
  $region49: #{tpu_custom_call.1} parent=0
    _
  %s6 = ssub.s32 1, %s4
  %s7 = scalar_select 0, %s6, %s4
  $region1: #{tpu_custom_call.1} parent=0
    #allocation2 [shape = 'u8[512]{0}', space=vmem, size = 0x400, scoped, tag = 'output window, operand 0, single buffered']
    #allocation3 [shape = 's32[2]{0}', space=sflag, size = 0x8, scoped, tag = 'scoped memory for tpu_custom_call.1']
    #allocation4 [shape = 'u8[512]{0}', space=vmem, size = 0x400, scoped, tag = 'output window, operand 1, single buffered']
    #allocation5 [shape = 's32[1]{0}', space=sflag, size = 0x4, scoped, tag = 'scoped memory for tpu_custom_call.1']
    %8 = vsyncpa [#allocation3], 0
    %9 = vsyncpa [#allocation5], 0
    loop: start=0, step=1, limit=6
    $region2: #{tpu_custom_call.1} parent=1 // loop_pre_header
      _
    $region3: #{tpu_custom_call.1} parent=1 // loop_header
      %s11 = sphi 0, %s15
      %p12 = scmp.ge.s32.totalorder %s11, 6
      %s21 = sphi 0, %s23
      %s24 = sphi 0, %s21
      %s25 = sphi 0, %s24
      %s41 = sphi 0, %s25
      %s45 = sphi 0, %s45
      %s47 = sphi 0, %s45
      %s48 = sphi 0, %s47
      %s62 = sphi 0, %s48
      %s66 = sphi 0, %s66
      %s68 = sphi 0, %s66
      %s69 = sphi 0, %s68
      %s83 = sphi 0, %s69
    $region4: #{tpu_custom_call.1} parent=1 // loop_header_branch
      %14 = sbr.rel (%p12) target = $region8
    $region5: #{tpu_custom_call.1} parent=1 // loop_body
      %s16 = ssub.s32 %s11, 1
      %s17 = ssub.s32 %s11, 2
      %s18 = sadd.s32 %s11, 1
      %s19 = ssub.s32 %s11, %s18
      %p20 = scmp.eq.s32.totalorder %s19, 0
      %s22 = sadd.s32 %s21, 1
      %s23 = scalar_select %p20, %s21, %s22
      %p26 = pneg %p20
      %p27 = scmp.eq.s32.totalorder %s11, 3
      %p28 = por %p26, %p27
      %p29 = scmp.ne.s32.totalorder %s21, %s24
      %p30 = scmp.eq.s32.totalorder %s11, 0
      %p31 = por %p29, %p30
      %p32 = scmp.ne.s32.totalorder %s21, %s24
      %p33 = scmp.eq.s32.totalorder %s16, 3
      %p34 = por %p32, %p33
      %p35 = scmp.ne.s32.totalorder %s24, %s25
      %p36 = scmp.eq.s32.totalorder %s16, 0
      %p37 = por %p35, %p36
      %p38 = scmp.ne.s32.totalorder %s24, %s25
      %p39 = scmp.eq.s32.totalorder %s17, 3
      %p40 = por %p38, %p39
      %p42 = scmp.ne.s32.totalorder %s25, %s41
      %p43 = scmp.eq.s32.totalorder %s17, 0
      %p44 = por %p42, %p43
      %s46 = sadd.s32 %s45, 1
      %p49 = scmp.eq.s32.totalorder %s11, 3
      %p50 = scmp.ne.s32.totalorder %s45, %s47
      %p51 = scmp.eq.s32.totalorder %s11, 0
      %p52 = por %p50, %p51
      %p53 = scmp.ne.s32.totalorder %s45, %s47
      %p54 = scmp.eq.s32.totalorder %s16, 3
      %p55 = por %p53, %p54
      %p56 = scmp.ne.s32.totalorder %s47, %s48
      %p57 = scmp.eq.s32.totalorder %s16, 0
      %p58 = por %p56, %p57
      %p59 = scmp.ne.s32.totalorder %s47, %s48
      %p60 = scmp.eq.s32.totalorder %s17, 3
      %p61 = por %p59, %p60
      %p63 = scmp.ne.s32.totalorder %s48, %s62
      %p64 = scmp.eq.s32.totalorder %s17, 0
      %p65 = por %p63, %p64
      %s67 = sadd.s32 %s66, 1
      %p70 = scmp.eq.s32.totalorder %s11, 3
      %p71 = scmp.ne.s32.totalorder %s66, %s68
      %p72 = scmp.eq.s32.totalorder %s11, 0
      %p73 = por %p71, %p72
      %p74 = scmp.ne.s32.totalorder %s66, %s68
      %p75 = scmp.eq.s32.totalorder %s16, 3
      %p76 = por %p74, %p75
      %p77 = scmp.ne.s32.totalorder %s68, %s69
      %p78 = scmp.eq.s32.totalorder %s16, 0
      %p79 = por %p77, %p78
      %p80 = scmp.ne.s32.totalorder %s68, %s69
      %p81 = scmp.eq.s32.totalorder %s17, 3
      %p82 = por %p80, %p81
      %p84 = scmp.ne.s32.totalorder %s69, %s83
      %p85 = scmp.eq.s32.totalorder %s17, 0
      %p86 = por %p84, %p85
      %p87 = scmp.le.s32.totalorder 1, %s11
      %p88 = scmp.lt.s32.totalorder %s11, 5
      %p89 = pnand %p87, %p88
      %p90 = pneg %p89
      // Predicated region
      $region9: #{tpu_custom_call.1} parent=5 // pred_check
        _
      $region10: #{tpu_custom_call.1} parent=5 // pred_check_branch
        %92 = sbr.rel (%p89) target = $region12
      $region11: #{tpu_custom_call.1} parent=5 // pred_region
        %s93 = ssub.s32 %s11, 1
      $region12: #{tpu_custom_call.1} parent=5 // pred_fallthru
        _
      %p94 = scmp.lt.s32.totalorder %s11, 4
      // Predicated region
      $region13: #{tpu_custom_call.1} parent=5 // pred_check
        %p95 = pneg %p94
      $region14: #{tpu_custom_call.1} parent=5 // pred_check_branch
        %97 = sbr.rel (%p95) target = $region16
      $region15: #{tpu_custom_call.1} parent=5 // pred_region
        // Predicated region
        $region17: #{tpu_custom_call.1} parent=15 // pred_check
          %p98 = pneg %p31
        $region18: #{tpu_custom_call.1} parent=15 // pred_check_branch
          %100 = sbr.rel (%p98) target = $region20
        $region19: #{tpu_custom_call.1} parent=15 // pred_region
          %p101 = scmp.lt.s32.totalorder %s11, 3
          %s102 = scalar_select %p101, %s11, 3
          %s103 = smul.addr %s102, 8
          %s104 = scalar_lea.vmem %s0, %s103
        $region20: #{tpu_custom_call.1} parent=15 // pred_fallthru
          _
      $region16: #{tpu_custom_call.1} parent=5 // pred_fallthru
        _
      %p105 = scmp.le.s32.totalorder 1, %s11
      %p106 = scmp.lt.s32.totalorder %s11, 5
      %p107 = pnand %p105, %p106
      %p108 = pneg %p107
      // Predicated region
      $region21: #{tpu_custom_call.1} parent=5 // pred_check
        _
      $region22: #{tpu_custom_call.1} parent=5 // pred_check_branch
        %110 = sbr.rel (%p107) target = $region24
      $region23: #{tpu_custom_call.1} parent=5 // pred_region
        %s111 = ssub.s32 %s11, 1
        %p112 = scmp.lt.s32.totalorder %s16, 3
        %s113 = scalar_select %p112, %s16, 3
        %s114 = smul.addr %s113, 8
        %s115 = scalar_lea.vmem %s0, %s114
        %p116 = pneg %p37
        %p117 = pneg %p34
        %p118 = pneg %p58
        %p119 = pneg %p55
        %p120 = pneg %p79
        %p121 = pneg %p76
        %p122 = scmp.lt.s32.totalorder %s16, 3
        %s123 = scalar_select %p122, %s16, 3
        %s124 = smul.addr %s123, 8
        %s125 = scalar_lea.vmem %s0, %s124
        %p126 = scmp.eq.s32.totalorder %s16, 0
        // Predicated region
        $region25: #{tpu_custom_call.1} parent=23 // pred_check
          %p127 = pneg %p126
        $region26: #{tpu_custom_call.1} parent=23 // pred_check_branch
          %129 = sbr.rel (%p127) target = $region28
        $region27: #{tpu_custom_call.1} parent=23 // pred_region
          %vm130 = vcmask 122880
          %131 = vst.msk [vmem:[#allocation2] sm:$0x1] %vm130, 0.0
          %132 = vst.msk [vmem:[#allocation4] sm:$0x1] %vm130, 0.0
        $region28: #{tpu_custom_call.1} parent=23 // pred_fallthru
          _
        %v133 = vld [vmem:[%s125] sm:$0xff]
        %v134 = vld [vmem:[#allocation2] sm:$0x1]
        %vm135 = vcmask 130048
        %v136 = vsel %vm135, %v133, 0.0
        %v137 = vrot.slane %v136, 4
        %v138 = vadd.f32 %v136, %v137
        %v139 = vrot.slane %v138, 2
        %v140 = vadd.f32 %v138, %v139
        %v141 = vrot.slane %v140, 1
        %v142 = vadd.f32 %v140, %v141
        %v143 = vadd.f32 %v134, %v142
        %vm144 = vcmask 122880
        %145 = vst.msk [vmem:[#allocation2] sm:$0x1] %vm144, %v143
        %v146 = vld [vmem:[#allocation4] sm:$0x1]
        %v147 = vmul.f32 %v133, %v133
        %v148 = vsel %vm135, %v147, 0.0
        %v149 = vrot.slane %v148, 4
        %v150 = vadd.f32 %v148, %v149
        %v151 = vrot.slane %v150, 2
        %v152 = vadd.f32 %v150, %v151
        %v153 = vrot.slane %v152, 1
        %v154 = vadd.f32 %v152, %v153
        %v155 = vadd.f32 %v146, %v154
        %156 = vst.msk [vmem:[#allocation4] sm:$0x1] %vm144, %v155
        // Predicated region
        $region29: #{tpu_custom_call.1} parent=23 // pred_check
          %p157 = pneg %p55
        $region30: #{tpu_custom_call.1} parent=23 // pred_check_branch
          %159 = sbr.rel (%p157) target = $region32
        $region31: #{tpu_custom_call.1} parent=23 // pred_region
          %s161 = ssub.s32 16, 16
          %162 = vsyncadd [#allocation3], %s161
          %s164 = sshll.u32 [#allocation2], 4
          %s165 = int_to_ptr.vmem [resolvable:$true] %s164
          %167 = dma.vmem_to_hbm [thread:$0]  %s165, 16, %s1, [#allocation3]
        $region32: #{tpu_custom_call.1} parent=23 // pred_fallthru
          _
        // Predicated region
        $region33: #{tpu_custom_call.1} parent=23 // pred_check
          %p168 = pneg %p76
        $region34: #{tpu_custom_call.1} parent=23 // pred_check_branch
          %170 = sbr.rel (%p168) target = $region36
        $region35: #{tpu_custom_call.1} parent=23 // pred_region
          %s172 = ssub.s32 16, 16
          %173 = vsyncadd [#allocation5], %s172
          %s175 = sshll.u32 [#allocation4], 4
          %s176 = int_to_ptr.vmem [resolvable:$true] %s175
          %178 = dma.vmem_to_hbm [thread:$0]  %s176, 16, %s2, [#allocation5]
        $region36: #{tpu_custom_call.1} parent=23 // pred_fallthru
          _
        // Predicated region
        $region37: #{tpu_custom_call.1} parent=23 // pred_check
          %p179 = pneg %p55
        $region38: #{tpu_custom_call.1} parent=23 // pred_check_branch
          %181 = sbr.rel (%p179) target = $region40
        $region39: #{tpu_custom_call.1} parent=23 // pred_region
          %182 = dma.done [#allocation3], 16
        $region40: #{tpu_custom_call.1} parent=23 // pred_fallthru
          _
        // Predicated region
        $region41: #{tpu_custom_call.1} parent=23 // pred_check
          %p183 = pneg %p76
        $region42: #{tpu_custom_call.1} parent=23 // pred_check_branch
          %185 = sbr.rel (%p183) target = $region44
        $region43: #{tpu_custom_call.1} parent=23 // pred_region
          %186 = dma.done [#allocation5], 16
        $region44: #{tpu_custom_call.1} parent=23 // pred_fallthru
          _
      $region24: #{tpu_custom_call.1} parent=5 // pred_fallthru
        _
      %p187 = scmp.le.s32.totalorder 2, %s11
      // Predicated region
      $region45: #{tpu_custom_call.1} parent=5 // pred_check
        %p188 = pneg %p187
      $region46: #{tpu_custom_call.1} parent=5 // pred_check_branch
        %190 = sbr.rel (%p188) target = $region48
      $region47: #{tpu_custom_call.1} parent=5 // pred_region
        %s191 = ssub.s32 %s11, 2
      $region48: #{tpu_custom_call.1} parent=5 // pred_fallthru
        _
    $region6: #{tpu_custom_call.1} parent=1 // loop_footer
      %s15 = sadd.s32 1, %s11
    $region7: #{tpu_custom_call.1} parent=1 // loop_footer_branch
      %10 = sbr.rel target = $region3
    $region8: #{tpu_custom_call.1} parent=1 // loop_exit
      _
    %192 = vsyncpa [#allocation3], 1
    %s193 = scalar_lea.sflag [#allocation3], 1
    %194 = vsyncpa %s193, 1
    %195 = vsyncpa [#allocation5], 1

</llo_original>
